<compile_context>
chip_gen: v6e
topology: v6e:2x2x1
jax: 0.10.0
libtpu: 0.0.40
codegen_flags: <defaults>
</compile_context>

<pallas_src>
import functools
import math

import jax
import jax.numpy as jnp
from jax.experimental import pallas as pl
from jax.experimental.pallas import tpu as pltpu


# ----------------------------------------------------------------------------
# Buffer construction (mirrors PositionalEncoding.__init__; returns the dense
# (max_len, d_model) table == the torch (max_len, 1, d_model) buffer squeezed)
# ----------------------------------------------------------------------------
def make_positional_encoding(d_model: int, max_len: int = 5000,
                             dtype=jnp.float32) -> jax.Array:
    position = jnp.arange(max_len, dtype=jnp.float32)[:, None]           # (L, 1)
    div_term = jnp.exp(jnp.arange(0, d_model, 2, dtype=jnp.float32)
                       * (-math.log(10000.0) / d_model))                 # (D/2,)
    pe = jnp.zeros((max_len, d_model), dtype=jnp.float32)
    pe = pe.at[:, 0::2].set(jnp.sin(position * div_term))
    pe = pe.at[:, 1::2].set(jnp.cos(position * div_term))
    return pe.astype(dtype)


# ----------------------------------------------------------------------------
# Kernels
# ----------------------------------------------------------------------------
def _broadcast_pe(pe_tile, batch: int, mode: str):
    """Broadcast the (ts, D) pe tile (already in VMEM) to the x-block layout.

    Broadcasting happens on-chip, so pe's HBM traffic stays (ts, D) per tile.
    """
    if mode == "rows":                       # x block (ts*B, D): rows=(s,b), lanes=d
        ts, d = pe_tile.shape
        return jnp.broadcast_to(pe_tile[:, None, :], (ts, batch, d)).reshape(
            ts * batch, d)
    # mode == "lanes": x block (ts, B*D): rows=s, lanes=(b,d)
    return jnp.tile(pe_tile, (1, batch))


def _pe_add_kernel(x_ref, pe_ref, o_ref, *, batch: int, mode: str):
    pe_b = _broadcast_pe(pe_ref[...], batch, mode).astype(x_ref.dtype)
    o_ref[...] = x_ref[...] + pe_b


def _pe_add_dropout_kernel(x_ref, pe_ref, bits_ref, o_ref, *, batch: int,
                           mode: str, thresh: int, inv_keep: float):
    pe_b = _broadcast_pe(pe_ref[...], batch, mode).astype(x_ref.dtype)
    y = x_ref[...] + pe_b
    # Unsigned 32-bit threshold compare: P(keep) = 1 - p.
    # (thresh is capped at 2**32 - 1, so p exactly 1.0 cannot drop everything.)
    keep = bits_ref[...] >= jnp.uint32(thresh)
    o_ref[...] = jnp.where(keep, y * inv_keep, jnp.zeros_like(y))


# ----------------------------------------------------------------------------
# Wrapper
# ----------------------------------------------------------------------------
def _pick_tile_s(S: int, row_bytes: int, target_bytes: int) -> int:
    """Sequence rows per tile: ~target_bytes of x per block, multiple of 8.

    Guidance: ~2 MiB on v5e, 4-8 MiB on v6e, 6-8 MiB on v7x (default 4 MiB is
    a good all-round compromise; override via tile_bytes=).
    """
    rows = (target_bytes // max(1, row_bytes)) // 8 * 8
    rows = max(8, int(rows))
    return S if rows >= S else rows


def positional_encoding_forward(x: jax.Array, pe: jax.Array,
                                key: jax.Array | None = None, *,
                                p: float = 0.1, training: bool = False,
                                tile_bytes: int = 4 << 20,
                                donate_x: bool = False) -> jax.Array:
    """x: (S, B, D) seq-first activations; pe: (max_len, D) (or (max_len,1,D))."""
    S, B, D = x.shape
    pe2 = pe[:S, 0, :] if pe.ndim == 3 else pe[:S]
    if pe2.dtype != x.dtype:
        pe2 = pe2.astype(x.dtype)

    # Lane/sublane-dense 2-D slab layout.
    if D % 128 == 0:
        mode, xf = "rows", x.reshape(S * B, D)
    else:
        mode, xf = "lanes", x.reshape(S, B * D)

    ts = _pick_tile_s(S, B * D * x.dtype.itemsize, tile_bytes)
    grid = (pl.cdiv(S, ts),)

    if mode == "rows":
        x_spec = pl.BlockSpec((ts * B, D), lambda i: (i, 0))
    else:
        x_spec = pl.BlockSpec((ts, B * D), lambda i: (i, 0))
    pe_spec = pl.BlockSpec((ts, D), lambda i: (i, 0))

    out_shape = jax.ShapeDtypeStruct(xf.shape, x.dtype)
    compiler_params = pltpu.CompilerParams(
        dimension_semantics=("parallel",),   # shard S-tiles across TCs (v7x)
        vmem_limit_bytes=40 << 20,           # headroom for >2 MiB tiles
    )
    io_alias = {0: 0} if donate_x else {}

    if training and p > 0.0:
        if key is None:
            key = jax.random.PRNGKey(0)
        # Portable dropout: 32-bit mask bits drawn outside the kernel (one
        # extra x-sized HBM read on the training path only).
        # TODO(synk): on real TPUs pltpu.prng_seed/prng_random_bits would
        # generate these bits in-kernel for free, but they have no
        # interpret-mode (CPU) lowering.
        bits = jax.random.bits(key, xf.shape, dtype=jnp.uint32)
        thresh = min(int(round(float(p) * (1 << 32))), (1 << 32) - 1)
        kernel = functools.partial(
            _pe_add_dropout_kernel, batch=B, mode=mode,
            thresh=thresh, inv_keep=1.0 / (1.0 - float(p)))
        yf = pl.pallas_call(
            kernel,
            out_shape=out_shape,
            grid=grid,
            in_specs=[x_spec, pe_spec, x_spec],
            out_specs=x_spec,
            input_output_aliases=io_alias,
            compiler_params=compiler_params,
        )(xf, pe2, bits)
    else:
        kernel = functools.partial(_pe_add_kernel, batch=B, mode=mode)
        yf = pl.pallas_call(
            kernel,
            out_shape=out_shape,
            grid=grid,
            in_specs=[x_spec, pe_spec],
            out_specs=x_spec,
            input_output_aliases=io_alias,
            compiler_params=compiler_params,
        )(xf, pe2)

    return yf.reshape(S, B, D)


# ----------------------------------------------------------------------------
# Demo / correctness check
# ----------------------------------------------------------------------------
if __name__ == "__main__":
    P_DROP = 0.1
    key = jax.random.PRNGKey(0)
    kx, kx2, kd = jax.random.split(key, 3)

    # Case 1: small dims (D < 128 -> lane-packed (S, B*D) layout).
    S, B, D = 8, 2, 32
    x = jax.random.normal(kx, (S, B, D), dtype=jnp.float32)
    pe = make_positional_encoding(D, max_len=64)

    y = jax.block_until_ready(
        positional_encoding_forward(x, pe, p=P_DROP, training=False))
    y_ref = x + pe[:S][:, None, :]
    assert y.shape == (S, B, D)
    assert jnp.allclose(y, y_ref, atol=1e-6, rtol=1e-6), "eval mismatch"

    # Training mode: inverted dropout (random stream differs from torch;
    # check structural semantics: every element is 0 or (x+pe)/(1-p)).
    y_tr = jax.block_until_ready(
        positional_encoding_forward(x, pe, kd, p=P_DROP, training=True))
    kept = jnp.isclose(y_tr, y_ref / (1.0 - P_DROP), atol=1e-5, rtol=1e-5)
    dropped = jnp.isclose(y_tr, 0.0, atol=1e-6)
    assert bool(jnp.all(kept | dropped)), "dropout output not {0, (x+pe)/(1-p)}"
    assert bool(jnp.any(kept)), "dropout dropped everything"

    # Case 2: D a multiple of 128 -> row-packed (S*B, D) layout.
    S2, B2, D2 = 16, 4, 128
    x2 = jax.random.normal(kx2, (S2, B2, D2), dtype=jnp.float32)
    pe_big = make_positional_encoding(D2, max_len=32)
    y2 = jax.block_until_ready(
        positional_encoding_forward(x2, pe_big, p=P_DROP, training=False))
    assert jnp.allclose(y2, x2 + pe_big[:S2][:, None, :],
                        atol=1e-6, rtol=1e-6), "rows-mode mismatch"

    print("KERNEL_OK")
</pallas_src>

<mosaic_0001>
module attributes {stable_mosaic.version = 11 : i64} {
  func.func @_pe_add_kernel(%arg0: i32, %arg1: memref<8x64xf32, #tpu.memory_space<vmem>>, %arg2: memref<8x32xf32, #tpu.memory_space<vmem>>, %arg3: memref<8x64xf32, #tpu.memory_space<vmem>>) attributes {dimension_semantics = [#tpu.dimension_semantics<parallel>], iteration_bounds = array<i64: 1>, scalar_prefetch = 0 : i64, scratch_operands = 0 : i64, tpu.core_type = #tpu.core_type<tc>, window_params = [{transform_indices = @transform_0, window_bounds = array<i64: 8, 64>}, {transform_indices = @transform_1, window_bounds = array<i64: 8, 32>}, {transform_indices = @transform_2, window_bounds = array<i64: 8, 64>}]} {
    %c0 = arith.constant 0 : index
    %c0_0 = arith.constant 0 : index
    %0 = vector.load %arg2[%c0, %c0_0] : memref<8x32xf32, #tpu.memory_space<vmem>>, vector<8x32xf32>
    %1 = tpu.concatenate %0, %0 in 1 : vector<8x32xf32>, vector<8x32xf32> -> vector<8x64xf32>
    %c0_1 = arith.constant 0 : index
    %c0_2 = arith.constant 0 : index
    %2 = vector.load %arg1[%c0_1, %c0_2] : memref<8x64xf32, #tpu.memory_space<vmem>>, vector<8x64xf32>
    %3 = arith.addf %2, %1 : vector<8x64xf32>
    %c0_3 = arith.constant 0 : index
    %c0_4 = arith.constant 0 : index
    %4 = vector.load %arg3[%c0_3, %c0_4] : memref<8x64xf32, #tpu.memory_space<vmem>>, vector<8x64xf32>
    tpu.vector_store %arg3[%c0_3, %c0_4], %3 {strides = array<i32>} : memref<8x64xf32, #tpu.memory_space<vmem>>, vector<8x64xf32>,
    return
  }
  func.func @transform_0(%arg0: i32) -> (i32, i32) {
    %c0_i32 = arith.constant 0 : i32
    %c0_i32_0 = arith.constant 0 : i32
    return %arg0, %c0_i32 : i32, i32
  }
  func.func @transform_1(%arg0: i32) -> (i32, i32) {
    %c0_i32 = arith.constant 0 : i32
    %c0_i32_0 = arith.constant 0 : i32
    return %arg0, %c0_i32 : i32, i32
  }
  func.func @transform_2(%arg0: i32) -> (i32, i32) {
    %c0_i32 = arith.constant 0 : i32
    %c0_i32_0 = arith.constant 0 : i32
    return %arg0, %c0_i32 : i32, i32
  }
}

</mosaic_0001>

<llo_original>
// kernel: tpu_custom_call.1
$region0: #{tpu_custom_call.1}
  #allocation0 [shape = 'u32[]', space=smem, size = 0x4, offset = 0x4, fixed_abs, tag = 'smem constant byte address 0x4 - core index']
  #allocation1 [shape = 'u32[144,128]{1,0:T(1,128)}', space=vmem, size = 0x12000, scoped, tag = 'internal scratch']
  %s0 = inlined_call_operand.hbm [shape: f32[8,64], index: 0, kind: input, shape index: {}]
  %s1 = inlined_call_operand.hbm [shape: f32[8,32], index: 1, kind: input, shape index: {}]
  %s2 = inlined_call_operand.hbm [shape: f32[8,64], index: 2, kind: output, shape index: {}]
  %s3 = sld [smem:[#allocation0]]
  $region26: #{tpu_custom_call.1} parent=0
    _
  %s5 = ssub.s32 1, %s3
  %s6 = scalar_select 0, %s5, %s3
  $region1: #{tpu_custom_call.1} parent=0
    #allocation2 [shape = 'u8[4096]{0}', space=vmem, size = 0x1000, scoped, tag = 'input window, operand 0, single buffered']
    #allocation3 [shape = 's32[1]{0}', space=sflag, size = 0x4, scoped, tag = 'scoped memory for tpu_custom_call.1']
    #allocation4 [shape = 's32[1]{0}', space=sflag, size = 0x4, scoped, tag = 'scoped memory for tpu_custom_call.1']
    #allocation5 [shape = 'u8[4096]{0}', space=vmem, size = 0x1000, scoped, tag = 'input window, operand 1, single buffered']
    #allocation6 [shape = 's32[1]{0}', space=sflag, size = 0x4, scoped, tag = 'scoped memory for tpu_custom_call.1']
    #allocation7 [shape = 'u8[4096]{0}', space=vmem, size = 0x1000, scoped, tag = 'output window, operand 0, single buffered']
    %7 = vsyncpa [#allocation3], 0
    %8 = vsyncpa [#allocation6], 0
    %9 = vsyncpa [#allocation4], 0
    // Predicated region
    $region2: #{tpu_custom_call.1} parent=1 // pred_check
      _
    $region3: #{tpu_custom_call.1} parent=1 // pred_check_branch
      %11 = sbr.rel (0) target = $region5
    $region4: #{tpu_custom_call.1} parent=1 // pred_region
      %s13 = ssub.s32 128, 128
      %14 = vsyncadd [#allocation3], %s13
      %s16 = sshll.u32 [#allocation2], 4
      %s17 = int_to_ptr.vmem [resolvable:$true] %s16
      %19 = dma.hbm_to_vmem [thread:$0]  %s0, 128, %s17, [#allocation3]
    $region5: #{tpu_custom_call.1} parent=1 // pred_fallthru
      _
    // Predicated region
    $region6: #{tpu_custom_call.1} parent=1 // pred_check
      _
    $region7: #{tpu_custom_call.1} parent=1 // pred_check_branch
      %21 = sbr.rel (0) target = $region9
    $region8: #{tpu_custom_call.1} parent=1 // pred_region
      %s23 = ssub.s32 128, 128
      %24 = vsyncadd [#allocation6], %s23
      %s26 = sshll.u32 [#allocation5], 4
      %s27 = int_to_ptr.vmem [resolvable:$true] %s26
      %29 = dma.hbm_to_vmem [thread:$0]  %s1, 128, %s27, [#allocation6]
    $region9: #{tpu_custom_call.1} parent=1 // pred_fallthru
      _
    // Predicated region
    $region10: #{tpu_custom_call.1} parent=1 // pred_check
      _
    $region11: #{tpu_custom_call.1} parent=1 // pred_check_branch
      %31 = sbr.rel (0) target = $region13
    $region12: #{tpu_custom_call.1} parent=1 // pred_region
      %32 = dma.done [#allocation3], 128
    $region13: #{tpu_custom_call.1} parent=1 // pred_fallthru
      _
    // Predicated region
    $region14: #{tpu_custom_call.1} parent=1 // pred_check
      _
    $region15: #{tpu_custom_call.1} parent=1 // pred_check_branch
      %34 = sbr.rel (0) target = $region17
    $region16: #{tpu_custom_call.1} parent=1 // pred_region
      %35 = dma.done [#allocation6], 128
    $region17: #{tpu_custom_call.1} parent=1 // pred_fallthru
      _
    %v36 = vld [vmem:[#allocation5] sm:$0xff]
    %38 = vrot.lane.b32.xlu0 %v36, 32
    %v39 = vpop.permute.xlu0 %38
    %vm41 = vcmask 261120
    %v42 = vsel %vm41, %v36, %v39
    %v43 = vld [vmem:[#allocation2] sm:$0xff]
    %v44 = vadd.f32 %v43, %v42
    %vm45 = vcmask 523264
    %46 = vst.msk [vmem:[#allocation7] sm:$0xff] %vm45, %v44
    // Predicated region
    $region18: #{tpu_custom_call.1} parent=1 // pred_check
      _
    $region19: #{tpu_custom_call.1} parent=1 // pred_check_branch
      %48 = sbr.rel (0) target = $region21
    $region20: #{tpu_custom_call.1} parent=1 // pred_region
      %s50 = ssub.s32 128, 128
      %51 = vsyncadd [#allocation4], %s50
      %s53 = sshll.u32 [#allocation7], 4
      %s54 = int_to_ptr.vmem [resolvable:$true] %s53
      %56 = dma.vmem_to_hbm [thread:$0]  %s54, 128, %s2, [#allocation4]
    $region21: #{tpu_custom_call.1} parent=1 // pred_fallthru
      _
    // Predicated region
    $region22: #{tpu_custom_call.1} parent=1 // pred_check
      _
    $region23: #{tpu_custom_call.1} parent=1 // pred_check_branch
      %58 = sbr.rel (0) target = $region25
    $region24: #{tpu_custom_call.1} parent=1 // pred_region
      %59 = dma.done [#allocation4], 128
    $region25: #{tpu_custom_call.1} parent=1 // pred_fallthru
      _
    %60 = vsyncpa [#allocation3], 1
    %61 = vsyncpa [#allocation6], 1
    %62 = vsyncpa [#allocation4], 1

</llo_original>
